<compile_context>
chip_gen: v7x
topology: tpu7x:2x2x1
jax: 0.10.0
libtpu: 0.0.40
codegen_flags: <defaults>
</compile_context>

<pallas_src>
import functools

import numpy as np
import jax
import jax.numpy as jnp
from jax.experimental import pallas as pl
from jax.experimental.pallas import tpu as pltpu


# ------------------------------ Pallas kernel ------------------------------

def _ce_sum_kernel(logits_ref, labels_ref, out_ref, *, ignore_lb):
    b = pl.program_id(0)

    x = logits_ref[0]                 # (C, P) f32 logits for this batch element
    lab = labels_ref[0]               # (1, P) i32 labels

    # numerically stable logsumexp over the channel (sublane) axis
    m = jnp.max(x, axis=0, keepdims=True)                                  # (1, P)
    lse = m + jnp.log(jnp.sum(jnp.exp(x - m), axis=0, keepdims=True))      # (1, P)

    # gather logits at the label channel: sum_c [c == label] * x[c]
    ch = jax.lax.broadcasted_iota(jnp.int32, x.shape, 0)                   # (C, P)
    picked = jnp.sum(jnp.where(ch == lab, x, 0.0), axis=0, keepdims=True)  # (1, P)

    # ignore_index pixels contribute 0 (reduction='none' semantics)
    valid = lab != ignore_lb
    loss = jnp.where(valid, lse - picked, 0.0)                             # (1, P)

    part = jnp.sum(loss, axis=-1, keepdims=True)                           # (1, 1)

    @pl.when(b == 0)
    def _():
        out_ref[...] = part           # write directly, no zero-init pass

    @pl.when(b != 0)
    def _():
        out_ref[...] += part


# --------------------------------- wrapper ---------------------------------

def normal_loss(logits, labels, ignore_lb=255):
    """logits: (N, C, H, W) float32, labels: (N, H, W) int.  Returns scalar f32."""
    n, c, h, w = logits.shape
    p = h * w

    # lane-dense layout: last dim = H*W (contiguous reshape, no copy)
    logits_flat = logits.reshape(n, c, p).astype(jnp.float32)
    labels_flat = labels.astype(jnp.int32).reshape(n, 1, p)

    kernel = functools.partial(_ce_sum_kernel, ignore_lb=int(ignore_lb))

    total = pl.pallas_call(
        kernel,
        out_shape=jax.ShapeDtypeStruct((1, 1), jnp.float32),
        grid_spec=pltpu.PrefetchScalarGridSpec(
            num_scalar_prefetch=0,
            grid=(n,),                                   # one step per batch elem
            in_specs=[
                pl.BlockSpec((1, c, p), lambda b: (b, 0, 0)),   # logits
                pl.BlockSpec((1, 1, p), lambda b: (b, 0, 0)),   # labels
            ],
            out_specs=pl.BlockSpec((1, 1), lambda b: (0, 0)),   # resident scalar acc
        ),
        compiler_params=pltpu.CompilerParams(
            dimension_semantics=("arbitrary",)),         # batch axis reduces into out
    )(logits_flat, labels_flat)

    # torch.mean over the 'none'-reduced tensor divides by N*H*W (ignored pixels
    # contribute 0 to the numerator but still count in the denominator).
    return total[0, 0] / jnp.float32(n * h * w)


# ------------------------- pure-JAX reference check -------------------------

def _reference(logits, labels, ignore_lb=255):
    lse = jax.nn.logsumexp(logits, axis=1)                     # (N, H, W)
    safe = jnp.where(labels == ignore_lb, 0, labels)
    picked = jnp.take_along_axis(logits, safe[:, None], axis=1)[:, 0]
    loss = jnp.where(labels == ignore_lb, 0.0, lse - picked)
    return jnp.mean(loss)


if __name__ == "__main__":
    key = jax.random.PRNGKey(0)
    k1, k2, k3 = jax.random.split(key, 3)

    n, c, h, w = 2, 4, 16, 16
    logits = jax.random.normal(k1, (n, c, h, w), dtype=jnp.float32)
    labels = jax.random.randint(k2, (n, h, w), 0, c, dtype=jnp.int32)
    # sprinkle in some ignored pixels to exercise ignore_index=255
    ignore_mask = jax.random.bernoulli(k3, 0.2, (n, h, w))
    labels = jnp.where(ignore_mask, jnp.int32(255), labels)

    out = normal_loss(logits, labels)
    out = jax.block_until_ready(out)
    assert out.shape == () and out.dtype == jnp.float32

    ref = _reference(logits, labels)
    np.testing.assert_allclose(np.asarray(out), np.asarray(ref), rtol=1e-5, atol=1e-5)

    print("KERNEL_OK")
</pallas_src>

<mosaic_0001>
module attributes {stable_mosaic.version = 11 : i64} {
  func.func @_ce_sum_kernel(%arg0: i32, %arg1: memref<1x4x256xf32, #tpu.memory_space<vmem>>, %arg2: memref<1x1x256xi32, #tpu.memory_space<vmem>>, %arg3: memref<1x1xf32, #tpu.memory_space<vmem>>) attributes {dimension_semantics = [#tpu.dimension_semantics<arbitrary>], iteration_bounds = array<i64: 2>, scalar_prefetch = 0 : i64, scratch_operands = 0 : i64, tpu.core_type = #tpu.core_type<tc>, window_params = [{transform_indices = @transform_0, window_bounds = array<i64: 1, 4, 256>}, {transform_indices = @transform_1, window_bounds = array<i64: 1, 1, 256>}, {pipeline_mode = #tpu.pipeline_mode<synchronous>, transform_indices = @transform_2, window_bounds = array<i64: 1, 1>}]} {
    %c0 = arith.constant 0 : index
    %c0_0 = arith.constant 0 : index
    %c0_1 = arith.constant 0 : index
    %0 = vector.load %arg1[%c0, %c0_0, %c0_1] : memref<1x4x256xf32, #tpu.memory_space<vmem>>, vector<1x4x256xf32>
    %1 = vector.shape_cast %0 : vector<1x4x256xf32> to vector<4x256xf32>
    %c0_2 = arith.constant 0 : index
    %c0_3 = arith.constant 0 : index
    %c0_4 = arith.constant 0 : index
    %2 = vector.load %arg2[%c0_2, %c0_3, %c0_4] : memref<1x1x256xi32, #tpu.memory_space<vmem>>, vector<1x1x256xi32>
    %3 = vector.shape_cast %2 : vector<1x1x256xi32> to vector<1x256xi32>
    %cst = arith.constant dense<0xFF800000> : vector<256xf32>
    %4 = vector.multi_reduction <maximumf>, %1, %cst [0] : vector<4x256xf32> to vector<256xf32>
    %5 = vector.shape_cast %4 : vector<256xf32> to vector<1x256xf32>
    %6 = vector.broadcast %5 : vector<1x256xf32> to vector<4x256xf32>
    %7 = arith.subf %1, %6 : vector<4x256xf32>
    %8 = math.exp %7 : vector<4x256xf32>
    %cst_5 = arith.constant dense<0.000000e+00> : vector<256xf32>
    %9 = vector.multi_reduction <add>, %8, %cst_5 [0] : vector<4x256xf32> to vector<256xf32>
    %10 = vector.shape_cast %9 : vector<256xf32> to vector<1x256xf32>
    %11 = math.log %10 : vector<1x256xf32>
    %12 = arith.addf %5, %11 : vector<1x256xf32>
    %13 = tpu.iota {dimensions = array<i32: 0>} : vector<4x256xi32>
    %14 = vector.broadcast %3 : vector<1x256xi32> to vector<4x256xi32>
    %15 = arith.cmpi eq, %13, %14 : vector<4x256xi32>
    %cst_6 = arith.constant 0.000000e+00 : f32
    %16 = vector.broadcast %cst_6 : f32 to vector<4x256xf32>
    %17 = arith.select %15, %1, %16 : vector<4x256xi1>, vector<4x256xf32>
    %cst_7 = arith.constant dense<0.000000e+00> : vector<256xf32>
    %18 = vector.multi_reduction <add>, %17, %cst_7 [0] : vector<4x256xf32> to vector<256xf32>
    %19 = vector.shape_cast %18 : vector<256xf32> to vector<1x256xf32>
    %c255_i32 = arith.constant 255 : i32
    %20 = vector.broadcast %c255_i32 : i32 to vector<1x256xi32>
    %21 = arith.cmpi ne, %3, %20 : vector<1x256xi32>
    %22 = arith.subf %12, %19 : vector<1x256xf32>
    %cst_8 = arith.constant 0.000000e+00 : f32
    %23 = vector.broadcast %cst_8 : f32 to vector<1x256xf32>
    %24 = arith.select %21, %22, %23 : vector<1x256xi1>, vector<1x256xf32>
    %cst_9 = arith.constant dense<0.000000e+00> : vector<1xf32>
    %25 = vector.multi_reduction <add>, %24, %cst_9 [1] : vector<1x256xf32> to vector<1xf32>
    %26 = vector.shape_cast %25 : vector<1xf32> to vector<1x1xf32>
    %c0_i32 = arith.constant 0 : i32
    %27 = arith.cmpi eq, %arg0, %c0_i32 : i32
    %28 = arith.extui %27 : i1 to i32
    %c0_i32_10 = arith.constant 0 : i32
    %29 = arith.cmpi ne, %28, %c0_i32_10 : i32
    scf.if %29 {
      %c0_13 = arith.constant 0 : index
      %c0_14 = arith.constant 0 : index
      %33 = vector.load %arg3[%c0_13, %c0_14] : memref<1x1xf32, #tpu.memory_space<vmem>>, vector<1x1xf32>
      tpu.vector_store %arg3[%c0_13, %c0_14], %26 {strides = array<i32>} : memref<1x1xf32, #tpu.memory_space<vmem>>, vector<1x1xf32>,
    } else {
    }
    %c0_i32_11 = arith.constant 0 : i32
    %30 = arith.cmpi ne, %arg0, %c0_i32_11 : i32
    %31 = arith.extui %30 : i1 to i32
    %c0_i32_12 = arith.constant 0 : i32
    %32 = arith.cmpi ne, %31, %c0_i32_12 : i32
    scf.if %32 {
      %c0_13 = arith.constant 0 : index
      %c0_14 = arith.constant 0 : index
      %33 = vector.load %arg3[%c0_13, %c0_14] : memref<1x1xf32, #tpu.memory_space<vmem>>, vector<1x1xf32>
      %34 = arith.addf %33, %26 : vector<1x1xf32>
      %c0_15 = arith.constant 0 : index
      %c0_16 = arith.constant 0 : index
      %35 = vector.load %arg3[%c0_15, %c0_16] : memref<1x1xf32, #tpu.memory_space<vmem>>, vector<1x1xf32>
      tpu.vector_store %arg3[%c0_15, %c0_16], %34 {strides = array<i32>} : memref<1x1xf32, #tpu.memory_space<vmem>>, vector<1x1xf32>,
    } else {
    }
    return
  }
  func.func @transform_0(%arg0: i32) -> (i32, i32, i32) {
    %c0_i32 = arith.constant 0 : i32
    %c0_i32_0 = arith.constant 0 : i32
    %c0_i32_1 = arith.constant 0 : i32
    return %arg0, %c0_i32, %c0_i32_0 : i32, i32, i32
  }
  func.func @transform_1(%arg0: i32) -> (i32, i32, i32) {
    %c0_i32 = arith.constant 0 : i32
    %c0_i32_0 = arith.constant 0 : i32
    %c0_i32_1 = arith.constant 0 : i32
    return %arg0, %c0_i32, %c0_i32_0 : i32, i32, i32
  }
  func.func @transform_2(%arg0: i32) -> (i32, i32) {
    %c0_i32 = arith.constant 0 : i32
    %c0_i32_0 = arith.constant 0 : i32
    %c0_i32_1 = arith.constant 0 : i32
    return %c0_i32, %c0_i32_0 : i32, i32
  }
}

</mosaic_0001>

<llo_original>
// kernel: tpu_custom_call.1
$region0: #{tpu_custom_call.1}
  #allocation0 [shape = 'u32[]', space=smem, size = 0x4, offset = 0x4, fixed_abs, tag = 'smem constant byte address 0x4 - core index']
  #allocation1 [shape = 'u32[144,128]{1,0:T(1,128)}', space=vmem, size = 0x12000, scoped, tag = 'internal scratch']
  %s0 = inlined_call_operand.hbm [shape: f32[2,4,256], index: 0, kind: input, shape index: {}]
  %s1 = inlined_call_operand.hbm [shape: s32[2,1,256], index: 1, kind: input, shape index: {}]
  %s2 = inlined_call_operand.hbm [shape: f32[1,1], index: 2, kind: output, shape index: {}]
  %s3 = sld [smem:[#allocation0]]
  $region57: #{tpu_custom_call.1} parent=0
    _
  %s5 = ssub.s32 1, %s3
  %s6 = scalar_select 0, %s5, %s3
  $region1: #{tpu_custom_call.1} parent=0
    #allocation2 [shape = 'u8[8192]{0}', space=vmem, size = 0x2000, scoped, tag = 'input window, operand 0']
    #allocation3 [shape = 's32[2]{0}', space=sflag, size = 0x8, scoped, tag = 'scoped memory for tpu_custom_call.1']
    #allocation4 [shape = 's32[2]{0}', space=sflag, size = 0x8, scoped, tag = 'scoped memory for tpu_custom_call.1']
    #allocation5 [shape = 'u8[2048]{0}', space=vmem, size = 0x800, scoped, tag = 'input window, operand 1']
    #allocation6 [shape = 's32[2]{0}', space=sflag, size = 0x8, scoped, tag = 'scoped memory for tpu_custom_call.1']
    #allocation7 [shape = 'u8[512]{0}', space=vmem, size = 0x400, scoped, tag = 'output window, operand 0, single buffered']
    %7 = vsyncpa [#allocation3], 0
    %s8 = scalar_lea.sflag [#allocation3], 1
    %9 = vsyncpa %s8, 0
    %10 = vsyncpa [#allocation6], 0
    %s11 = scalar_lea.sflag [#allocation6], 1
    %12 = vsyncpa %s11, 0
    %13 = vsyncpa [#allocation4], 0
    loop: start=0, step=1, limit=4
    $region2: #{tpu_custom_call.1} parent=1 // loop_pre_header
      _
    $region3: #{tpu_custom_call.1} parent=1 // loop_header
      %s15 = sphi 0, %s19
      %p16 = scmp.ge.s32.totalorder %s15, 4
      %s25 = sphi 0, %s27
      %s28 = sphi 0, %s25
      %s29 = sphi 0, %s28
      %s45 = sphi 0, %s29
      %s51 = sphi 0, %s53
      %s54 = sphi 0, %s51
      %s55 = sphi 0, %s54
      %s71 = sphi 0, %s55
      %s75 = sphi 0, %s75
      %s77 = sphi 0, %s75
      %s78 = sphi 0, %s77
      %s92 = sphi 0, %s78
    $region4: #{tpu_custom_call.1} parent=1 // loop_header_branch
      %18 = sbr.rel (%p16) target = $region8
    $region5: #{tpu_custom_call.1} parent=1 // loop_body
      %s20 = ssub.s32 %s15, 1
      %s21 = ssub.s32 %s15, 2
      %s22 = sadd.s32 %s15, 1
      %s23 = ssub.s32 %s15, %s22
      %p24 = scmp.eq.s32.totalorder %s23, 0
      %s26 = sadd.s32 %s25, 1
      %s27 = scalar_select %p24, %s25, %s26
      %p30 = pneg %p24
      %p31 = scmp.eq.s32.totalorder %s15, 1
      %p32 = por %p30, %p31
      %p33 = scmp.ne.s32.totalorder %s25, %s28
      %p34 = scmp.eq.s32.totalorder %s15, 0
      %p35 = por %p33, %p34
      %p36 = scmp.ne.s32.totalorder %s25, %s28
      %p37 = scmp.eq.s32.totalorder %s20, 1
      %p38 = por %p36, %p37
      %p39 = scmp.ne.s32.totalorder %s28, %s29
      %p40 = scmp.eq.s32.totalorder %s20, 0
      %p41 = por %p39, %p40
      %p42 = scmp.ne.s32.totalorder %s28, %s29
      %p43 = scmp.eq.s32.totalorder %s21, 1
      %p44 = por %p42, %p43
      %p46 = scmp.ne.s32.totalorder %s29, %s45
      %p47 = scmp.eq.s32.totalorder %s21, 0
      %p48 = por %p46, %p47
      %s49 = ssub.s32 %s15, %s22
      %p50 = scmp.eq.s32.totalorder %s49, 0
      %s52 = sadd.s32 %s51, 1
      %s53 = scalar_select %p50, %s51, %s52
      %p56 = pneg %p50
      %p57 = scmp.eq.s32.totalorder %s15, 1
      %p58 = por %p56, %p57
      %p59 = scmp.ne.s32.totalorder %s51, %s54
      %p60 = scmp.eq.s32.totalorder %s15, 0
      %p61 = por %p59, %p60
      %p62 = scmp.ne.s32.totalorder %s51, %s54
      %p63 = scmp.eq.s32.totalorder %s20, 1
      %p64 = por %p62, %p63
      %p65 = scmp.ne.s32.totalorder %s54, %s55
      %p66 = scmp.eq.s32.totalorder %s20, 0
      %p67 = por %p65, %p66
      %p68 = scmp.ne.s32.totalorder %s54, %s55
      %p69 = scmp.eq.s32.totalorder %s21, 1
      %p70 = por %p68, %p69
      %p72 = scmp.ne.s32.totalorder %s55, %s71
      %p73 = scmp.eq.s32.totalorder %s21, 0
      %p74 = por %p72, %p73
      %s76 = sadd.s32 %s75, 1
      %p79 = scmp.eq.s32.totalorder %s15, 1
      %p80 = scmp.ne.s32.totalorder %s75, %s77
      %p81 = scmp.eq.s32.totalorder %s15, 0
      %p82 = por %p80, %p81
      %p83 = scmp.ne.s32.totalorder %s75, %s77
      %p84 = scmp.eq.s32.totalorder %s20, 1
      %p85 = por %p83, %p84
      %p86 = scmp.ne.s32.totalorder %s77, %s78
      %p87 = scmp.eq.s32.totalorder %s20, 0
      %p88 = por %p86, %p87
      %p89 = scmp.ne.s32.totalorder %s77, %s78
      %p90 = scmp.eq.s32.totalorder %s21, 1
      %p91 = por %p89, %p90
      %p93 = scmp.ne.s32.totalorder %s78, %s92
      %p94 = scmp.eq.s32.totalorder %s21, 0
      %p95 = por %p93, %p94
      %p96 = scmp.le.s32.totalorder 1, %s15
      %p97 = scmp.lt.s32.totalorder %s15, 3
      %p98 = pnand %p96, %p97
      %p99 = pneg %p98
      // Predicated region
      $region9: #{tpu_custom_call.1} parent=5 // pred_check
        _
      $region10: #{tpu_custom_call.1} parent=5 // pred_check_branch
        %101 = sbr.rel (%p98) target = $region12
      $region11: #{tpu_custom_call.1} parent=5 // pred_region
        %s102 = ssub.s32 %s15, 1
      $region12: #{tpu_custom_call.1} parent=5 // pred_fallthru
        _
      %p103 = scmp.lt.s32.totalorder %s15, 2
      // Predicated region
      $region13: #{tpu_custom_call.1} parent=5 // pred_check
        %p104 = pneg %p103
      $region14: #{tpu_custom_call.1} parent=5 // pred_check_branch
        %106 = sbr.rel (%p104) target = $region16
      $region15: #{tpu_custom_call.1} parent=5 // pred_region
        // Predicated region
        $region17: #{tpu_custom_call.1} parent=15 // pred_check
          %p107 = pneg %p35
        $region18: #{tpu_custom_call.1} parent=15 // pred_check_branch
          %109 = sbr.rel (%p107) target = $region20
        $region19: #{tpu_custom_call.1} parent=15 // pred_region
          %s110 = sand.u32 %s25, 1
          %s111 = scalar_lea.sflag [#allocation3], %s110
          %s112 = sand.u32 %s25, 1
          %s113 = smul.addr %s112, 8
          %s114 = scalar_lea.vmem [#allocation2], %s113
          %s116 = ssub.s32 128, 128
          %117 = vsyncadd %s111, %s116
          %s118 = smul.addr %s15, 2
          %s119 = smul.addr %s118, 64
          %s120 = scalar_lea.hbm %s0, %s119
          %s122 = sshll.u32 %s114, 4
          %s123 = int_to_ptr.vmem [resolvable:$true] %s122
          %125 = dma.hbm_to_vmem [thread:$0]  %s120, 128, %s123, %s111
        $region20: #{tpu_custom_call.1} parent=15 // pred_fallthru
          _
        // Predicated region
        $region21: #{tpu_custom_call.1} parent=15 // pred_check
          %p126 = pneg %p61
        $region22: #{tpu_custom_call.1} parent=15 // pred_check_branch
          %128 = sbr.rel (%p126) target = $region24
        $region23: #{tpu_custom_call.1} parent=15 // pred_region
          %s129 = sand.u32 %s51, 1
          %s130 = scalar_lea.sflag [#allocation6], %s129
          %s131 = sand.u32 %s51, 1
          %s132 = smul.addr %s131, 2
          %s133 = scalar_lea.vmem [#allocation5], %s132
          %s135 = ssub.s32 32, 32
          %136 = vsyncadd %s130, %s135
          %s137 = smul.addr %s15, 2
          %s138 = smul.addr %s137, 16
          %s139 = scalar_lea.hbm %s1, %s138
          %s141 = sshll.u32 %s133, 4
          %s142 = int_to_ptr.vmem [resolvable:$true] %s141
          %144 = dma.hbm_to_vmem [thread:$0]  %s139, 32, %s142, %s130
        $region24: #{tpu_custom_call.1} parent=15 // pred_fallthru
          _
      $region16: #{tpu_custom_call.1} parent=5 // pred_fallthru
        _
      %p145 = scmp.le.s32.totalorder 1, %s15
      %p146 = scmp.lt.s32.totalorder %s15, 3
      %p147 = pnand %p145, %p146
      %p148 = pneg %p147
      // Predicated region
      $region25: #{tpu_custom_call.1} parent=5 // pred_check
        _
      $region26: #{tpu_custom_call.1} parent=5 // pred_check_branch
        %150 = sbr.rel (%p147) target = $region28
      $region27: #{tpu_custom_call.1} parent=5 // pred_region
        %s151 = ssub.s32 %s15, 1
        %s152 = sand.u32 %s28, 1
        %s153 = scalar_lea.sflag [#allocation3], %s152
        %s154 = sand.u32 %s28, 1
        %s155 = smul.addr %s154, 8
        %s156 = scalar_lea.vmem [#allocation2], %s155
        // Predicated region
        $region29: #{tpu_custom_call.1} parent=27 // pred_check
          %p157 = pneg %p41
        $region30: #{tpu_custom_call.1} parent=27 // pred_check_branch
          %159 = sbr.rel (%p157) target = $region32
        $region31: #{tpu_custom_call.1} parent=27 // pred_region
          %160 = dma.done %s153, 128
        $region32: #{tpu_custom_call.1} parent=27 // pred_fallthru
          _
        %s161 = sand.u32 %s54, 1
        %s162 = scalar_lea.sflag [#allocation6], %s161
        %s163 = sand.u32 %s54, 1
        %s164 = smul.addr %s163, 2
        %s165 = scalar_lea.vmem [#allocation5], %s164
        // Predicated region
        $region33: #{tpu_custom_call.1} parent=27 // pred_check
          %p166 = pneg %p67
        $region34: #{tpu_custom_call.1} parent=27 // pred_check_branch
          %168 = sbr.rel (%p166) target = $region36
        $region35: #{tpu_custom_call.1} parent=27 // pred_region
          %169 = dma.done %s162, 32
        $region36: #{tpu_custom_call.1} parent=27 // pred_fallthru
          _
        %s170 = sand.u32 %s28, 1
        %s171 = scalar_lea.sflag [#allocation3], %s170
        %s172 = sand.u32 %s28, 1
        %s173 = smul.addr %s172, 8
        %s174 = scalar_lea.vmem [#allocation2], %s173
        %p175 = pneg %p41
        %p176 = pneg %p38
        %s177 = sand.u32 %s54, 1
        %s178 = scalar_lea.sflag [#allocation6], %s177
        %s179 = sand.u32 %s54, 1
        %s180 = smul.addr %s179, 2
        %s181 = scalar_lea.vmem [#allocation5], %s180
        %p182 = pneg %p67
        %p183 = pneg %p64
        %p184 = pneg %p88
        %p185 = pneg %p85
        %v186 = vld [vmem:[%s156] sm:$0xff]
        %v187 = vld [vmem:[%s165] sm:$0x3]
        %v189 = vcombine.high %v186, %v186
        %vm191 = vcmask 1043456
        %v192 = vsel %vm191, %v186, -inf
        %v193 = vrot.slane %v192, 4
        %v194 = vmax.f32 %v192, %v193
        %v195 = vrot.slane %v194, 2
        %v196 = vmax.f32 %v194, %v195
        %v197 = vrot.slane %v196, 1
        %v198 = vmax.f32 %v196, %v197
        %v199 = vsel %vm191, %v189, -inf
        %v200 = vrot.slane %v199, 4
        %v201 = vmax.f32 %v199, %v200
        %v202 = vrot.slane %v201, 2
        %v203 = vmax.f32 %v201, %v202
        %v204 = vrot.slane %v203, 1
        %v205 = vmax.f32 %v203, %v204
        %v208 = vcombine.low %v198, %v205
        %v210 = vsub.f32 %v186, %v208
        %v211 = vmul.f32 %v210, 1.442695
        %v212 = vpow.pop %v211
        %v214 = vcombine.high %v212, %v212
        %v216 = vsel %vm191, %v212, 0.0
        %v217 = vrot.slane %v216, 4
        %v218 = vadd.f32 %v216, %v217
        %v219 = vrot.slane %v218, 2
        %v220 = vadd.f32 %v218, %v219
        %v221 = vrot.slane %v220, 1
        %v222 = vadd.f32 %v220, %v221
        %v223 = vsel %vm191, %v214, 0.0
        %v224 = vrot.slane %v223, 4
        %v225 = vadd.f32 %v223, %v224
        %v226 = vrot.slane %v225, 2
        %v227 = vadd.f32 %v225, %v226
        %v228 = vrot.slane %v227, 1
        %v229 = vadd.f32 %v227, %v228
        %v230 = vlog2.pop %v222
        %v231 = vmul.f32 %v230, 0.6931472
        %v232 = vlog2.pop %v229
        %v233 = vmul.f32 %v232, 0.6931472
        %v234 = vadd.f32 %v198, %v231
        %v235 = vadd.f32 %v205, %v233
        %v236 = vlaneseq
        %v237 = vshrl.u32 %v236, 7
        %v238 = vlaneseq
        %v239 = vshrl.u32 %v238, 7
        %v240 = vsub.s32 0, %v239
        %v241 = vrot.slane %v187, %v240
        %v242 = vlaneseq
        %v243 = vshrl.u32 %v242, 7
        %v244 = vsub.s32 1, %v243
        %v245 = vrot.slane %v187, %v244
        %vm246 = vcmp.eq.s32.totalorder %v237, %v241
        %vm247 = vcmp.eq.s32.totalorder %v237, %v245
        %v248 = vsel %vm246, %v186, 0.0
        %v249 = vsel %vm247, %v189, 0.0
        %v250 = vsel %vm191, %v248, 0.0
        %v251 = vrot.slane %v250, 4
        %v252 = vadd.f32 %v250, %v251
        %v253 = vrot.slane %v252, 2
        %v254 = vadd.f32 %v252, %v253
        %v255 = vrot.slane %v254, 1
        %v256 = vadd.f32 %v254, %v255
        %v257 = vsel %vm191, %v249, 0.0
        %v258 = vrot.slane %v257, 4
        %v259 = vadd.f32 %v257, %v258
        %v260 = vrot.slane %v259, 2
        %v261 = vadd.f32 %v259, %v260
        %v262 = vrot.slane %v261, 1
        %v263 = vadd.f32 %v261, %v262
        %vm264 = vcmp.ne.s32.totalorder %v187, 255
        %v265 = vsub.f32 %v234, %v256
        %v266 = vsub.f32 %v235, %v263
        %v269 = vcombine.low %v265, %v266
        %v271 = vunpack.c.l.s4 1966171168
        %v272 = vunpack.c.0.s8 %v271
        %v273 = vlaneseq
        %v274 = vshrl.u32 %v273, 7
        %v275 = vsub.s32 %v272, %v274
        %v276 = vrot.slane %v269, %v275
        %v278 = vunpack.c.l.s4 1966171168
        %v279 = vunpack.c.0.s8 %v278
        %v280 = vlaneseq
        %v281 = vshrl.u32 %v280, 7
        %v282 = vsub.s32 %v279, %v281
        %v283 = vrot.slane %v276, %v282
        %v285 = vsel %vm264, %v283, 0.0
        %v287 = vlaneseq
        %v288 = vshrl.u32 %v287, 7
        %v289 = vsub.s32 0, %v288
        %v290 = vrot.slane %v285, %v289
        %v291 = vlaneseq
        %v292 = vshrl.u32 %v291, 7
        %v293 = vsub.s32 1, %v292
        %v294 = vrot.slane %v285, %v293
        %vm297 = vcmask 1040384
        %v298 = vsel %vm297, %v290, 0.0
        %v299 = vsel %vm297, %v294, 0.0
        %v300 = vadd.f32 %v298, %v299
        %301 = vadd.xlane.f32.xlu0 %v300
        %v302 = vpop.xlane.xlu0 %301
        %p303 = scmp.eq.s32.totalorder %s20, 0
        // Predicated region
        $region37: #{tpu_custom_call.1} parent=27 // pred_check
          %p304 = pneg %p303
        $region38: #{tpu_custom_call.1} parent=27 // pred_check_branch
          %306 = sbr.rel (%p304) target = $region40
        $region39: #{tpu_custom_call.1} parent=27 // pred_region
          %vm307 = vcmask 0
          %308 = vst.msk [vmem:[#allocation7] sm:$0x1] %vm307, %v302
        $region40: #{tpu_custom_call.1} parent=27 // pred_fallthru
          _
        %p309 = scmp.ne.s32.totalorder %s20, 0
        // Predicated region
        $region41: #{tpu_custom_call.1} parent=27 // pred_check
          %p310 = pneg %p309
        $region42: #{tpu_custom_call.1} parent=27 // pred_check_branch
          %312 = sbr.rel (%p310) target = $region44
        $region43: #{tpu_custom_call.1} parent=27 // pred_region
          %v313 = vld [vmem:[#allocation7] sm:$0x1]
          %v314 = vadd.f32 %v313, %v302
          %vm315 = vcmask 0
          %316 = vst.msk [vmem:[#allocation7] sm:$0x1] %vm315, %v314
        $region44: #{tpu_custom_call.1} parent=27 // pred_fallthru
          _
        // Predicated region
        $region45: #{tpu_custom_call.1} parent=27 // pred_check
          %p317 = pneg %p85
        $region46: #{tpu_custom_call.1} parent=27 // pred_check_branch
          %319 = sbr.rel (%p317) target = $region48
        $region47: #{tpu_custom_call.1} parent=27 // pred_region
          %s321 = ssub.s32 16, 16
          %322 = vsyncadd [#allocation4], %s321
          %s324 = sshll.u32 [#allocation7], 4
          %s325 = int_to_ptr.vmem [resolvable:$true] %s324
          %327 = dma.vmem_to_hbm [thread:$0]  %s325, 16, %s2, [#allocation4]
        $region48: #{tpu_custom_call.1} parent=27 // pred_fallthru
          _
        // Predicated region
        $region49: #{tpu_custom_call.1} parent=27 // pred_check
          %p328 = pneg %p85
        $region50: #{tpu_custom_call.1} parent=27 // pred_check_branch
          %330 = sbr.rel (%p328) target = $region52
        $region51: #{tpu_custom_call.1} parent=27 // pred_region
          %331 = dma.done [#allocation4], 16
        $region52: #{tpu_custom_call.1} parent=27 // pred_fallthru
          _
      $region28: #{tpu_custom_call.1} parent=5 // pred_fallthru
        _
      %p332 = scmp.le.s32.totalorder 2, %s15
      // Predicated region
      $region53: #{tpu_custom_call.1} parent=5 // pred_check
        %p333 = pneg %p332
      $region54: #{tpu_custom_call.1} parent=5 // pred_check_branch
        %335 = sbr.rel (%p333) target = $region56
      $region55: #{tpu_custom_call.1} parent=5 // pred_region
        %s336 = ssub.s32 %s15, 2
      $region56: #{tpu_custom_call.1} parent=5 // pred_fallthru
        _
    $region6: #{tpu_custom_call.1} parent=1 // loop_footer
      %s19 = sadd.s32 1, %s15
    $region7: #{tpu_custom_call.1} parent=1 // loop_footer_branch
      %14 = sbr.rel target = $region3
    $region8: #{tpu_custom_call.1} parent=1 // loop_exit
      _
    %337 = vsyncpa [#allocation3], 1
    %s338 = scalar_lea.sflag [#allocation3], 1
    %339 = vsyncpa %s338, 1
    %340 = vsyncpa [#allocation6], 1
    %s341 = scalar_lea.sflag [#allocation6], 1
    %342 = vsyncpa %s341, 1
    %343 = vsyncpa [#allocation4], 1
    %s344 = scalar_lea.sflag [#allocation4], 1
    %345 = vsyncpa %s344, 1

</llo_original>
